<compile_context>
chip_gen: v5e
topology: v5e:2x2
jax: 0.10.0
libtpu: 0.0.40
codegen_flags: <defaults>
</compile_context>

<pallas_src>
import functools

import jax
import jax.numpy as jnp
from jax import lax
from jax.experimental import pallas as pl
from jax.experimental.pallas import tpu as pltpu


def _round_up(x, m):
    return ((x + m - 1) // m) * m


def _vmem_capacity_bytes():
    """Physical VMEM per TensorCore, with a conservative fallback."""
    try:
        info = pltpu.get_tpu_info()
        for name in ("vmem_capacity_bytes", "vmem_size_bytes", "vmem_bytes"):
            cap = getattr(info, name, None)
            if cap:
                return int(cap)
    except Exception:
        pass
    return 64 * 1024 * 1024  # v7x per-TC size == safe lower bound everywhere


def _pick_chunk(t):
    """Largest lane-aligned sub-chunk (512-1024 preferred) dividing the tile."""
    for c in (1024, 512, 256, 128):
        if t % c == 0:
            return c
    return t  # non-128-multiple full-extent block: single chunk


def outconv_kernel(x_ref, w_ref, b_ref, o_ref, *, chunk):
    # x_ref: (C_in, T)   spatial-on-lanes (lane-dense)
    # w_ref: (C_out, C_in)  VMEM-resident (constant index map)
    # b_ref: (C_out, 1)     VMEM-resident
    # o_ref: (C_out, T)
    c_out, c_in = w_ref.shape
    t = o_ref.shape[-1]

    if c_in * c_out > 64:
        # Larger channel counts: one MXU matmul over the whole block with f32
        # accumulation (operands stream from VMEM; nothing big lives in vregs).
        w = w_ref[...]
        if w.dtype != x_ref.dtype:
            w = w.astype(x_ref.dtype)
        b = b_ref[...]
        if b.dtype != jnp.float32:
            b = b.astype(jnp.float32)
        acc = jnp.dot(w, x_ref[...], preferred_element_type=jnp.float32)
        o_ref[...] = (acc + b).astype(o_ref.dtype)
        return

    # Tiny channel counts (typical UNet OutConv): accumulating VPU MACs over
    # C_in on spatial sub-chunks -- no (C_out, C_in, T) intermediate, no VMEM
    # spill traffic, bias folded into the accumulator init.
    w = w_ref[...]
    if w.dtype != jnp.float32:
        w = w.astype(jnp.float32)
    b = b_ref[...]
    if b.dtype != jnp.float32:
        b = b.astype(jnp.float32)
    w_cols = [w[:, c:c + 1] for c in range(c_in)]      # (C_out, 1) each, hoisted
    b_init = jnp.broadcast_to(b, (c_out, chunk))        # hoisted: once per step

    def mac(xb):                                        # xb: (C_in, chunk)
        if xb.dtype != jnp.float32:
            xb = xb.astype(jnp.float32)
        acc = b_init                                    # bias folded in
        for c in range(c_in):
            acc = acc + w_cols[c] * xb[c:c + 1, :]
        return acc.astype(o_ref.dtype)

    n_chunks = t // chunk
    if n_chunks <= 1:
        # chunk == t by construction: whole-block compute, no dynamic slices.
        o_ref[...] = mac(x_ref[...])
    else:
        def body(j, carry):
            start = pl.multiple_of(j * chunk, chunk)
            o_ref[:, pl.ds(start, chunk)] = mac(x_ref[:, pl.ds(start, chunk)])
            return carry

        lax.fori_loop(0, n_chunks, body, 0)


def outconv(x_nchw, weight, bias, *, vmem_budget_bytes=None):
    """Forward pass of nn.Conv2d(C_in, C_out, kernel_size=1) on NCHW input."""
    N, C_in, H, W = x_nchw.shape
    C_out = weight.shape[0]
    HW = H * W

    # Free reshapes only (no transposes / no extra HBM passes).
    x_mat = x_nchw.reshape(N, C_in, HW)
    w_mat = weight.reshape(C_out, C_in)
    b_col = bias.reshape(C_out, 1)

    in_bytes = jnp.dtype(x_nchw.dtype).itemsize
    out_bytes = in_bytes

    def sublane(nbytes):             # f32 -> 8, bf16 -> 16, int8 -> 32
        return max(8, 32 // max(1, nbytes))

    c_in_pad = _round_up(C_in, sublane(in_bytes))
    c_out_pad = _round_up(C_out, sublane(out_bytes))

    # Double-buffered input + output block bytes per lane column (sublane
    # padding included -- ignoring it blows the v7x/v5e scoped VMEM budgets).
    bytes_per_col = 2 * (c_in_pad * in_bytes + c_out_pad * out_bytes)

    vmem_cap = _vmem_capacity_bytes()
    if vmem_budget_bytes is None:
        # ~32 MiB of pipelined blocks on 128 MiB parts (v5e/v6e -> ~256K lanes
        # for tiny channels), ~16 MiB on v7x's 64 MiB VMEM (-> ~128K lanes).
        vmem_budget_bytes = min(vmem_cap // 4, 32 * 1024 * 1024)

    t_hw = max(128, (vmem_budget_bytes // bytes_per_col) // 128 * 128)
    if HW <= t_hw:
        t_hw = HW
        if N == 1 and HW > 128:
            # v7x megacore: never leave one TensorCore idle on a (1, 1) grid.
            t_hw = _round_up(-(-HW // 2), 128)

    chunk = _pick_chunk(t_hw)
    grid = (N, pl.cdiv(HW, t_hw))

    # Scoped VMEM: explicitly cover the pipelined blocks (+ headroom) so the
    # large tiles also work under v5e's 16 MiB scoped default.
    vmem_limit = int(min(vmem_cap,
                         max(16 * 1024 * 1024,
                             bytes_per_col * t_hw + (8 << 20))))

    cost = pl.CostEstimate(
        flops=2 * N * HW * C_in * C_out,
        transcendentals=0,
        bytes_accessed=(N * HW * (C_in * in_bytes + C_out * out_bytes)
                        + C_out * C_in * jnp.dtype(weight.dtype).itemsize
                        + C_out * jnp.dtype(bias.dtype).itemsize),
    )

    out_mat = pl.pallas_call(
        functools.partial(outconv_kernel, chunk=chunk),
        out_shape=jax.ShapeDtypeStruct((N, C_out, HW), x_nchw.dtype),
        grid_spec=pltpu.PrefetchScalarGridSpec(
            num_scalar_prefetch=0,
            grid=grid,
            in_specs=[
                # (batch squeezed, C_in, spatial tile) -- lane-dense input.
                pl.BlockSpec((None, C_in, t_hw), lambda n, t: (n, 0, t)),
                # Weight / bias: constant index maps -> stay VMEM-resident.
                pl.BlockSpec((C_out, C_in), lambda n, t: (0, 0)),
                pl.BlockSpec((C_out, 1), lambda n, t: (0, 0)),
            ],
            out_specs=pl.BlockSpec((None, C_out, t_hw), lambda n, t: (n, 0, t)),
        ),
        compiler_params=pltpu.CompilerParams(
            dimension_semantics=("parallel", "parallel"),
            vmem_limit_bytes=vmem_limit,
        ),
        cost_estimate=cost,
    )(x_mat, w_mat, b_col)

    return out_mat.reshape(N, C_out, H, W)


if __name__ == "__main__":
    key = jax.random.PRNGKey(0)
    k_x, k_w, k_b, k_x2, k_w2, k_b2 = jax.random.split(key, 6)

    # --- Test 1: typical OutConv shape (VPU MAC path) ---
    N, C_in, C_out, H, W = 2, 4, 3, 16, 16
    x = jax.random.normal(k_x, (N, C_in, H, W), dtype=jnp.float32)
    bound = 1.0 / (C_in ** 0.5)
    weight = jax.random.uniform(
        k_w, (C_out, C_in, 1, 1), minval=-bound, maxval=bound, dtype=jnp.float32
    )
    bias = jax.random.uniform(
        k_b, (C_out,), minval=-bound, maxval=bound, dtype=jnp.float32
    )

    out = jax.block_until_ready(outconv(x, weight, bias))
    ref = (
        jnp.einsum("nchw,oc->nohw", x, weight.reshape(C_out, C_in))
        + bias[None, :, None, None]
    )
    assert out.shape == (N, C_out, H, W)
    assert jnp.allclose(out, ref, atol=1e-5, rtol=1e-5)

    # --- Test 2: larger channel count (MXU path), single batch ---
    N2, C_in2, C_out2, H2, W2 = 1, 32, 16, 8, 8
    x2 = jax.random.normal(k_x2, (N2, C_in2, H2, W2), dtype=jnp.float32)
    bound2 = 1.0 / (C_in2 ** 0.5)
    weight2 = jax.random.uniform(
        k_w2, (C_out2, C_in2, 1, 1), minval=-bound2, maxval=bound2, dtype=jnp.float32
    )
    bias2 = jax.random.uniform(
        k_b2, (C_out2,), minval=-bound2, maxval=bound2, dtype=jnp.float32
    )

    out2 = jax.block_until_ready(outconv(x2, weight2, bias2))
    ref2 = (
        jnp.einsum("nchw,oc->nohw", x2, weight2.reshape(C_out2, C_in2))
        + bias2[None, :, None, None]
    )
    assert jnp.allclose(out2, ref2, atol=1e-4, rtol=1e-4)

    print("KERNEL_OK")
</pallas_src>

<mosaic_0001>
module attributes {stable_mosaic.version = 11 : i64} {
  func.func @outconv_kernel(%arg0: i32, %arg1: i32, %arg2: memref<1x4x256xf32, #tpu.memory_space<vmem>>, %arg3: memref<3x4xf32, #tpu.memory_space<vmem>>, %arg4: memref<3x1xf32, #tpu.memory_space<vmem>>, %arg5: memref<1x3x256xf32, #tpu.memory_space<vmem>>) attributes {dimension_semantics = [#tpu.dimension_semantics<parallel>, #tpu.dimension_semantics<parallel>], iteration_bounds = array<i64: 2, 1>, scalar_prefetch = 0 : i64, scratch_operands = 0 : i64, tpu.core_type = #tpu.core_type<tc>, window_params = [{transform_indices = @transform_0, window_bounds = array<i64: 1, 4, 256>}, {pipeline_mode = #tpu.pipeline_mode<synchronous>, transform_indices = @transform_1, window_bounds = array<i64: 3, 4>}, {pipeline_mode = #tpu.pipeline_mode<synchronous>, transform_indices = @transform_2, window_bounds = array<i64: 3, 1>}, {transform_indices = @transform_3, window_bounds = array<i64: 1, 3, 256>}]} {
    %c0 = arith.constant 0 : index
    %c0_0 = arith.constant 0 : index
    %0 = vector.load %arg3[%c0, %c0_0] : memref<3x4xf32, #tpu.memory_space<vmem>>, vector<3x4xf32>
    %c0_1 = arith.constant 0 : index
    %c0_2 = arith.constant 0 : index
    %1 = vector.load %arg4[%c0_1, %c0_2] : memref<3x1xf32, #tpu.memory_space<vmem>>, vector<3x1xf32>
    %2 = vector.extract_strided_slice %0 {offsets = [0, 0], sizes = [3, 1], strides = [1, 1]} : vector<3x4xf32> to vector<3x1xf32>
    %3 = vector.extract_strided_slice %0 {offsets = [0, 1], sizes = [3, 1], strides = [1, 1]} : vector<3x4xf32> to vector<3x1xf32>
    %4 = vector.extract_strided_slice %0 {offsets = [0, 2], sizes = [3, 1], strides = [1, 1]} : vector<3x4xf32> to vector<3x1xf32>
    %5 = vector.extract_strided_slice %0 {offsets = [0, 3], sizes = [3, 1], strides = [1, 1]} : vector<3x4xf32> to vector<3x1xf32>
    %6 = vector.shape_cast %1 : vector<3x1xf32> to vector<3x1xf32>
    %7 = vector.broadcast %6 : vector<3x1xf32> to vector<3x256xf32>
    %c0_3 = arith.constant 0 : index
    %c0_4 = arith.constant 0 : index
    %c0_5 = arith.constant 0 : index
    %8 = vector.load %arg2[%c0_3, %c0_4, %c0_5] : memref<1x4x256xf32, #tpu.memory_space<vmem>>, vector<1x4x256xf32>
    %9 = vector.shape_cast %8 : vector<1x4x256xf32> to vector<4x256xf32>
    %10 = vector.extract_strided_slice %9 {offsets = [0, 0], sizes = [1, 256], strides = [1, 1]} : vector<4x256xf32> to vector<1x256xf32>
    %11 = vector.broadcast %2 : vector<3x1xf32> to vector<3x256xf32>
    %12 = vector.broadcast %10 : vector<1x256xf32> to vector<3x256xf32>
    %13 = arith.mulf %11, %12 : vector<3x256xf32>
    %14 = arith.addf %7, %13 : vector<3x256xf32>
    %15 = vector.extract_strided_slice %9 {offsets = [1, 0], sizes = [1, 256], strides = [1, 1]} : vector<4x256xf32> to vector<1x256xf32>
    %16 = vector.broadcast %3 : vector<3x1xf32> to vector<3x256xf32>
    %17 = vector.broadcast %15 : vector<1x256xf32> to vector<3x256xf32>
    %18 = arith.mulf %16, %17 : vector<3x256xf32>
    %19 = arith.addf %14, %18 : vector<3x256xf32>
    %20 = vector.extract_strided_slice %9 {offsets = [2, 0], sizes = [1, 256], strides = [1, 1]} : vector<4x256xf32> to vector<1x256xf32>
    %21 = vector.broadcast %4 : vector<3x1xf32> to vector<3x256xf32>
    %22 = vector.broadcast %20 : vector<1x256xf32> to vector<3x256xf32>
    %23 = arith.mulf %21, %22 : vector<3x256xf32>
    %24 = arith.addf %19, %23 : vector<3x256xf32>
    %25 = vector.extract_strided_slice %9 {offsets = [3, 0], sizes = [1, 256], strides = [1, 1]} : vector<4x256xf32> to vector<1x256xf32>
    %26 = vector.broadcast %5 : vector<3x1xf32> to vector<3x256xf32>
    %27 = vector.broadcast %25 : vector<1x256xf32> to vector<3x256xf32>
    %28 = arith.mulf %26, %27 : vector<3x256xf32>
    %29 = arith.addf %24, %28 : vector<3x256xf32>
    %c0_6 = arith.constant 0 : index
    %c0_7 = arith.constant 0 : index
    %c0_8 = arith.constant 0 : index
    %30 = vector.load %arg5[%c0_6, %c0_7, %c0_8] : memref<1x3x256xf32, #tpu.memory_space<vmem>>, vector<1x3x256xf32>
    %31 = vector.shape_cast %30 : vector<1x3x256xf32> to vector<3x256xf32>
    %32 = vector.shape_cast %29 : vector<3x256xf32> to vector<1x3x256xf32>
    tpu.vector_store %arg5[%c0_6, %c0_7, %c0_8], %32 {strides = array<i32>} : memref<1x3x256xf32, #tpu.memory_space<vmem>>, vector<1x3x256xf32>,
    return
  }
  func.func @transform_0(%arg0: i32, %arg1: i32) -> (i32, i32, i32) {
    %c0_i32 = arith.constant 0 : i32
    %c0_i32_0 = arith.constant 0 : i32
    return %arg0, %c0_i32, %arg1 : i32, i32, i32
  }
  func.func @transform_1(%arg0: i32, %arg1: i32) -> (i32, i32) {
    %c0_i32 = arith.constant 0 : i32
    %c0_i32_0 = arith.constant 0 : i32
    %c0_i32_1 = arith.constant 0 : i32
    return %c0_i32, %c0_i32_0 : i32, i32
  }
  func.func @transform_2(%arg0: i32, %arg1: i32) -> (i32, i32) {
    %c0_i32 = arith.constant 0 : i32
    %c0_i32_0 = arith.constant 0 : i32
    %c0_i32_1 = arith.constant 0 : i32
    return %c0_i32, %c0_i32_0 : i32, i32
  }
  func.func @transform_3(%arg0: i32, %arg1: i32) -> (i32, i32, i32) {
    %c0_i32 = arith.constant 0 : i32
    %c0_i32_0 = arith.constant 0 : i32
    return %arg0, %c0_i32, %arg1 : i32, i32, i32
  }
}

</mosaic_0001>

<llo_original>
// kernel: tpu_custom_call.1
$region0: #{tpu_custom_call.1}
  #allocation0 [shape = 'u32[]', space=smem, size = 0x4, offset = 0x4, fixed_abs, tag = 'smem constant byte address 0x4 - core index']
  #allocation1 [shape = 'u32[72,128]{1,0:T(1,128)}', space=vmem, size = 0x9000, scoped, tag = 'internal scratch']
  %s0 = inlined_call_operand.hbm [shape: f32[2,4,256], index: 0, kind: input, shape index: {}]
  %s1 = inlined_call_operand.vmem [shape: f32[3,4], index: 1, kind: input, shape index: {}]
  %s2 = inlined_call_operand.vmem [shape: f32[3,1], index: 2, kind: input, shape index: {}]
  %s3 = inlined_call_operand.vmem [shape: f32[2,3,256], index: 3, kind: output, shape index: {}]
  %s4 = sld [smem:[#allocation0]]
  $region49: #{tpu_custom_call.1} parent=0
    _
  %s6 = ssub.s32 1, %s4
  %s7 = scalar_select 0, %s6, %s4
  $region1: #{tpu_custom_call.1} parent=0
    #allocation2 [shape = 'u8[8192]{0}', space=vmem, size = 0x2000, scoped, tag = 'input window, operand 0']
    #allocation3 [shape = 's32[2]{0}', space=sflag, size = 0x8, scoped, tag = 'scoped memory for tpu_custom_call.1']
    %8 = vsyncpa [#allocation3], 0
    %s9 = scalar_lea.sflag [#allocation3], 1
    %10 = vsyncpa %s9, 0
    loop: start=0, step=1, limit=4
    $region2: #{tpu_custom_call.1} parent=1 // loop_pre_header
      _
    $region3: #{tpu_custom_call.1} parent=1 // loop_header
      %s12 = sphi 0, %s16
      %p13 = scmp.ge.s32.totalorder %s12, 4
      %s19 = sphi 0, %s31
      %s20 = sphi 0, %s27
      %s21 = sphi 0, %s19
      %s22 = sphi 0, %s20
      %s23 = sphi 0, %s21
      %s24 = sphi 0, %s22
      %s36 = sphi 0, %s38
      %s39 = sphi 0, %s36
      %s40 = sphi 0, %s39
      %s56 = sphi 0, %s40
      %s60 = sphi 0, %s60
      %s62 = sphi 0, %s60
      %s63 = sphi 0, %s62
      %s77 = sphi 0, %s63
      %s81 = sphi 0, %s81
      %s83 = sphi 0, %s81
      %s84 = sphi 0, %s83
      %s98 = sphi 0, %s84
      %s106 = sphi 0, %s108
      %s109 = sphi 0, %s106
      %s110 = sphi 0, %s109
      %s126 = sphi 0, %s110
    $region4: #{tpu_custom_call.1} parent=1 // loop_header_branch
      %15 = sbr.rel (%p13) target = $region8
    $region5: #{tpu_custom_call.1} parent=1 // loop_body
      %s17 = ssub.s32 %s12, 1
      %s18 = ssub.s32 %s12, 2
      %s25 = sadd.s32 1, %s20
      %p26 = scmp.ge.s32.totalorder %s25, 1
      %s27 = scalar_select %p26, 0, %s25
      %s28 = sadd.s32 1, %s19
      %s29 = scalar_select %p26, %s28, %s19
      %p30 = scmp.ge.s32.totalorder %s29, 2
      %s31 = scalar_select %p30, 0, %s29
      %s32 = ssub.s32 %s19, %s31
      %s33 = ssub.s32 %s20, %s27
      %s34 = sor.u32 %s32, %s33
      %p35 = scmp.eq.s32.totalorder %s34, 0
      %s37 = sadd.s32 %s36, 1
      %s38 = scalar_select %p35, %s36, %s37
      %p41 = pneg %p35
      %p42 = scmp.eq.s32.totalorder %s12, 1
      %p43 = por %p41, %p42
      %p44 = scmp.ne.s32.totalorder %s36, %s39
      %p45 = scmp.eq.s32.totalorder %s12, 0
      %p46 = por %p44, %p45
      %p47 = scmp.ne.s32.totalorder %s36, %s39
      %p48 = scmp.eq.s32.totalorder %s17, 1
      %p49 = por %p47, %p48
      %p50 = scmp.ne.s32.totalorder %s39, %s40
      %p51 = scmp.eq.s32.totalorder %s17, 0
      %p52 = por %p50, %p51
      %p53 = scmp.ne.s32.totalorder %s39, %s40
      %p54 = scmp.eq.s32.totalorder %s18, 1
      %p55 = por %p53, %p54
      %p57 = scmp.ne.s32.totalorder %s40, %s56
      %p58 = scmp.eq.s32.totalorder %s18, 0
      %p59 = por %p57, %p58
      %s61 = sadd.s32 %s60, 1
      %p64 = scmp.eq.s32.totalorder %s12, 1
      %p65 = scmp.ne.s32.totalorder %s60, %s62
      %p66 = scmp.eq.s32.totalorder %s12, 0
      %p67 = por %p65, %p66
      %p68 = scmp.ne.s32.totalorder %s60, %s62
      %p69 = scmp.eq.s32.totalorder %s17, 1
      %p70 = por %p68, %p69
      %p71 = scmp.ne.s32.totalorder %s62, %s63
      %p72 = scmp.eq.s32.totalorder %s17, 0
      %p73 = por %p71, %p72
      %p74 = scmp.ne.s32.totalorder %s62, %s63
      %p75 = scmp.eq.s32.totalorder %s18, 1
      %p76 = por %p74, %p75
      %p78 = scmp.ne.s32.totalorder %s63, %s77
      %p79 = scmp.eq.s32.totalorder %s18, 0
      %p80 = por %p78, %p79
      %s82 = sadd.s32 %s81, 1
      %p85 = scmp.eq.s32.totalorder %s12, 1
      %p86 = scmp.ne.s32.totalorder %s81, %s83
      %p87 = scmp.eq.s32.totalorder %s12, 0
      %p88 = por %p86, %p87
      %p89 = scmp.ne.s32.totalorder %s81, %s83
      %p90 = scmp.eq.s32.totalorder %s17, 1
      %p91 = por %p89, %p90
      %p92 = scmp.ne.s32.totalorder %s83, %s84
      %p93 = scmp.eq.s32.totalorder %s17, 0
      %p94 = por %p92, %p93
      %p95 = scmp.ne.s32.totalorder %s83, %s84
      %p96 = scmp.eq.s32.totalorder %s18, 1
      %p97 = por %p95, %p96
      %p99 = scmp.ne.s32.totalorder %s84, %s98
      %p100 = scmp.eq.s32.totalorder %s18, 0
      %p101 = por %p99, %p100
      %s102 = ssub.s32 %s19, %s31
      %s103 = ssub.s32 %s20, %s27
      %s104 = sor.u32 %s102, %s103
      %p105 = scmp.eq.s32.totalorder %s104, 0
      %s107 = sadd.s32 %s106, 1
      %s108 = scalar_select %p105, %s106, %s107
      %p111 = pneg %p105
      %p112 = scmp.eq.s32.totalorder %s12, 1
      %p113 = por %p111, %p112
      %p114 = scmp.ne.s32.totalorder %s106, %s109
      %p115 = scmp.eq.s32.totalorder %s12, 0
      %p116 = por %p114, %p115
      %p117 = scmp.ne.s32.totalorder %s106, %s109
      %p118 = scmp.eq.s32.totalorder %s17, 1
      %p119 = por %p117, %p118
      %p120 = scmp.ne.s32.totalorder %s109, %s110
      %p121 = scmp.eq.s32.totalorder %s17, 0
      %p122 = por %p120, %p121
      %p123 = scmp.ne.s32.totalorder %s109, %s110
      %p124 = scmp.eq.s32.totalorder %s18, 1
      %p125 = por %p123, %p124
      %p127 = scmp.ne.s32.totalorder %s110, %s126
      %p128 = scmp.eq.s32.totalorder %s18, 0
      %p129 = por %p127, %p128
      %p130 = scmp.le.s32.totalorder 1, %s12
      %p131 = scmp.lt.s32.totalorder %s12, 3
      %p132 = pnand %p130, %p131
      %p133 = pneg %p132
      // Predicated region
      $region9: #{tpu_custom_call.1} parent=5 // pred_check
        _
      $region10: #{tpu_custom_call.1} parent=5 // pred_check_branch
        %135 = sbr.rel (%p132) target = $region12
      $region11: #{tpu_custom_call.1} parent=5 // pred_region
        %s136 = ssub.s32 %s12, 1
        // Predicated region
        $region13: #{tpu_custom_call.1} parent=11 // pred_check
          %p137 = pneg %p73
        $region14: #{tpu_custom_call.1} parent=11 // pred_check_branch
          %139 = sbr.rel (%p137) target = $region16
        $region15: #{tpu_custom_call.1} parent=11 // pred_region
          _
        $region16: #{tpu_custom_call.1} parent=11 // pred_fallthru
          _
        // Predicated region
        $region17: #{tpu_custom_call.1} parent=11 // pred_check
          %p140 = pneg %p94
        $region18: #{tpu_custom_call.1} parent=11 // pred_check_branch
          %142 = sbr.rel (%p140) target = $region20
        $region19: #{tpu_custom_call.1} parent=11 // pred_region
          _
        $region20: #{tpu_custom_call.1} parent=11 // pred_fallthru
          _
      $region12: #{tpu_custom_call.1} parent=5 // pred_fallthru
        _
      %p143 = scmp.lt.s32.totalorder %s12, 2
      // Predicated region
      $region21: #{tpu_custom_call.1} parent=5 // pred_check
        %p144 = pneg %p143
      $region22: #{tpu_custom_call.1} parent=5 // pred_check_branch
        %146 = sbr.rel (%p144) target = $region24
      $region23: #{tpu_custom_call.1} parent=5 // pred_region
        // Predicated region
        $region25: #{tpu_custom_call.1} parent=23 // pred_check
          %p147 = pneg %p46
        $region26: #{tpu_custom_call.1} parent=23 // pred_check_branch
          %149 = sbr.rel (%p147) target = $region28
        $region27: #{tpu_custom_call.1} parent=23 // pred_region
          %s150 = sand.u32 %s36, 1
          %s151 = scalar_lea.sflag [#allocation3], %s150
          %s152 = sand.u32 %s36, 1
          %s153 = smul.addr %s152, 8
          %s154 = scalar_lea.vmem [#allocation2], %s153
          %s155 = smul.u32 2, %s20
          %157 = vsyncadd %s151, 0
          %s158 = smul.addr %s19, 2
          %s159 = sadd.s32 %s155, %s158
          %s160 = smul.addr %s159, 4
          %s161 = scalar_lea.hbm %s0, %s160
          %s163 = sshll.u32 %s161, 4
          %s164 = int_to_ptr.hbm [resolvable:$true] %s163
          %s165 = sshll.u32 %s154, 4
          %s166 = int_to_ptr.vmem [resolvable:$true] %s165
          %168 = dma.hbm_to_vmem [thread:$0]  %s164, 128, %s166, %s151
        $region28: #{tpu_custom_call.1} parent=23 // pred_fallthru
          _
      $region24: #{tpu_custom_call.1} parent=5 // pred_fallthru
        _
      %p169 = scmp.le.s32.totalorder 1, %s12
      %p170 = scmp.lt.s32.totalorder %s12, 3
      %p171 = pnand %p169, %p170
      %p172 = pneg %p171
      // Predicated region
      $region29: #{tpu_custom_call.1} parent=5 // pred_check
        _
      $region30: #{tpu_custom_call.1} parent=5 // pred_check_branch
        %174 = sbr.rel (%p171) target = $region32
      $region31: #{tpu_custom_call.1} parent=5 // pred_region
        %s175 = ssub.s32 %s12, 1
        %s176 = sand.u32 %s39, 1
        %s177 = scalar_lea.sflag [#allocation3], %s176
        %s178 = sand.u32 %s39, 1
        %s179 = smul.addr %s178, 8
        %s180 = scalar_lea.vmem [#allocation2], %s179
        // Predicated region
        $region33: #{tpu_custom_call.1} parent=31 // pred_check
          %p181 = pneg %p52
        $region34: #{tpu_custom_call.1} parent=31 // pred_check_branch
          %183 = sbr.rel (%p181) target = $region36
        $region35: #{tpu_custom_call.1} parent=31 // pred_region
          %185 = dma.done %s177, 128
        $region36: #{tpu_custom_call.1} parent=31 // pred_fallthru
          _
        %s186 = sand.u32 %s39, 1
        %s187 = scalar_lea.sflag [#allocation3], %s186
        %s188 = sand.u32 %s39, 1
        %s189 = smul.addr %s188, 8
        %s190 = scalar_lea.vmem [#allocation2], %s189
        %p191 = pneg %p52
        %p192 = pneg %p49
        %p193 = pneg %p73
        %p194 = pneg %p70
        %p195 = pneg %p94
        %p196 = pneg %p91
        %p197 = pneg %p122
        %p198 = pneg %p119
        %s199 = smul.u32 2, %s22
        %p200 = scmp.lt.s32.totalorder %s21, 1
        %s201 = scalar_select %p200, %s21, 1
        %p202 = scmp.lt.s32.totalorder %s199, 1
        %s203 = scalar_select %p202, %s199, 1
        %s204 = smul.addr %s201, 2
        %s205 = sadd.s32 %s203, %s204
        %s206 = smul.addr %s205, 4
        %s207 = scalar_lea.vmem %s3, %s206
        %s208 = smul.u32 2, %s22
        %s209 = smul.u32 2, %s22
        %p210 = scmp.lt.s32.totalorder %s21, 1
        %s211 = scalar_select %p210, %s21, 1
        %p212 = scmp.lt.s32.totalorder %s209, 1
        %s213 = scalar_select %p212, %s209, 1
        %s214 = smul.addr %s211, 2
        %s215 = sadd.s32 %s213, %s214
        %s216 = smul.addr %s215, 4
        %s217 = scalar_lea.vmem %s3, %s216
        %s218 = smul.u32 2, %s22
        %v219 = vld [vmem:[%s1] sm:$0x7]
        %v220 = vld [vmem:[%s2] sm:$0x7]
        %222 = vset.pattern.permute.xlu0 0
        %223 = vperm.xlu0 %222, %v220
        %v224 = vpop.permute.xlu0 %223
        %v226 = vld [vmem:[%s180] sm:$0xff]
        %228 = vset.pattern.permute.xlu0 0
        %229 = vperm.xlu0 %228, %v219
        %v230 = vpop.permute.xlu0 %229
        %v233 = vperm.slane %v226, 0
        %v234 = vperm.slane %v226, 4
        %v237 = vperm.slane %v233, 0
        %v238 = vperm.slane %v234, 0
        %v239 = vmul.f32 %v230, %v237
        %v240 = vmul.f32 %v230, %v238
        %v241 = vadd.f32 %v224, %v239
        %v242 = vadd.f32 %v224, %v240
        %243 = vset.pattern.permute.xlu0 1
        %244 = vperm.xlu0 %243, %v219
        %v245 = vpop.permute.xlu0 %244
        %v247 = vperm.slane %v226, 1
        %v248 = vperm.slane %v226, 5
        %v251 = vperm.slane %v247, 1
        %v252 = vperm.slane %v248, 1
        %v253 = vmul.f32 %v245, %v251
        %v254 = vmul.f32 %v245, %v252
        %v255 = vadd.f32 %v241, %v253
        %v256 = vadd.f32 %v242, %v254
        %257 = vset.pattern.permute.xlu0 2
        %258 = vperm.xlu0 %257, %v219
        %v259 = vpop.permute.xlu0 %258
        %v261 = vperm.slane %v226, 2
        %v262 = vperm.slane %v226, 6
        %v265 = vperm.slane %v261, 2
        %v266 = vperm.slane %v262, 2
        %v267 = vmul.f32 %v259, %v265
        %v268 = vmul.f32 %v259, %v266
        %v269 = vadd.f32 %v255, %v267
        %v270 = vadd.f32 %v256, %v268
        %271 = vset.pattern.permute.xlu0 3
        %272 = vperm.xlu0 %271, %v219
        %v273 = vpop.permute.xlu0 %272
        %v275 = vperm.slane %v226, 3
        %v276 = vperm.slane %v226, 7
        %v279 = vperm.slane %v275, 3
        %v280 = vperm.slane %v276, 3
        %v281 = vmul.f32 %v273, %v279
        %v282 = vmul.f32 %v273, %v280
        %v283 = vadd.f32 %v269, %v281
        %v284 = vadd.f32 %v270, %v282
        %v287 = vrot.slane %v284, 4
        %vm288 = vcmask 1043456
        %v289 = vsel %vm288, %v283, %v287
        %291 = vst [vmem:[%s217] sm:$0x77] %v289
        %s292 = smul.u32 2, %s22
        %p293 = scmp.lt.s32.totalorder %s21, 1
        %s294 = scalar_select %p293, %s21, 1
        %p295 = scmp.lt.s32.totalorder %s292, 1
        %s296 = scalar_select %p295, %s292, 1
        %s297 = smul.addr %s294, 2
        %s298 = sadd.s32 %s296, %s297
        %s299 = smul.addr %s298, 4
        %s300 = scalar_lea.vmem %s3, %s299
        // Predicated region
        $region37: #{tpu_custom_call.1} parent=31 // pred_check
          %p301 = pneg %p119
        $region38: #{tpu_custom_call.1} parent=31 // pred_check_branch
          %303 = sbr.rel (%p301) target = $region40
        $region39: #{tpu_custom_call.1} parent=31 // pred_region
          %s304 = smul.u32 2, %s22
        $region40: #{tpu_custom_call.1} parent=31 // pred_fallthru
          _
      $region32: #{tpu_custom_call.1} parent=5 // pred_fallthru
        _
      %p305 = scmp.le.s32.totalorder 2, %s12
      // Predicated region
      $region41: #{tpu_custom_call.1} parent=5 // pred_check
        %p306 = pneg %p305
      $region42: #{tpu_custom_call.1} parent=5 // pred_check_branch
        %308 = sbr.rel (%p306) target = $region44
      $region43: #{tpu_custom_call.1} parent=5 // pred_region
        %s309 = ssub.s32 %s12, 2
        // Predicated region
        $region45: #{tpu_custom_call.1} parent=43 // pred_check
          %p310 = pneg %p125
        $region46: #{tpu_custom_call.1} parent=43 // pred_check_branch
          %312 = sbr.rel (%p310) target = $region48
        $region47: #{tpu_custom_call.1} parent=43 // pred_region
          %s313 = smul.u32 2, %s24
          %p314 = scmp.lt.s32.totalorder %s23, 1
          %s315 = scalar_select %p314, %s23, 1
          %p316 = scmp.lt.s32.totalorder %s313, 1
          %s317 = scalar_select %p316, %s313, 1
          %s318 = smul.addr %s315, 2
          %s319 = sadd.s32 %s317, %s318
          %s320 = smul.addr %s319, 4
          %s321 = scalar_lea.vmem %s3, %s320
        $region48: #{tpu_custom_call.1} parent=43 // pred_fallthru
          _
      $region44: #{tpu_custom_call.1} parent=5 // pred_fallthru
        _
    $region6: #{tpu_custom_call.1} parent=1 // loop_footer
      %s16 = sadd.s32 1, %s12
    $region7: #{tpu_custom_call.1} parent=1 // loop_footer_branch
      %11 = sbr.rel target = $region3
    $region8: #{tpu_custom_call.1} parent=1 // loop_exit
      _
    %322 = vsyncpa [#allocation3], 1
    %s323 = scalar_lea.sflag [#allocation3], 1
    %324 = vsyncpa %s323, 1

</llo_original>
